<compile_context>
chip_gen: v5e
topology: v5e:2x2
jax: 0.10.0
libtpu: 0.0.40
codegen_flags: <defaults>
</compile_context>

<pallas_src>
import functools

import jax
import jax.numpy as jnp
from jax.experimental import pallas as pl
from jax.experimental.pallas import tpu as pltpu


def _self_attn_kernel(x_ref, wqT_ref, wk_ref, wv_ref,
                      bq_ref, bk_ref, bv_ref, gamma_ref, o_ref, *, tq):
    """One (batch, query-tile) grid step.

    x_ref   : (C, N)   full flattened feature map for this batch element
    wqT_ref : (C, Cq)  query 1x1-conv weight, pre-transposed
    wk_ref  : (Cq, C)  key   1x1-conv weight
    wv_ref  : (C, C)   value 1x1-conv weight
    bq_ref  : (1, Cq), bk_ref: (Cq, 1), bv_ref: (C, 1)
    gamma_ref: (1, 1)
    o_ref   : (C, tq)  output tile (lane-dense: tq is a multiple of 128 or N)
    """
    x_full = x_ref[...]                                     # (C, N)

    start = pl.multiple_of(pl.program_id(1) * tq, tq)
    x_q = x_ref[:, pl.ds(start, tq)]                        # (C, tq)

    # --- 1x1 convs as channel matmuls on the MXU (f32 accumulate) ---
    k = jnp.dot(wk_ref[...], x_full,
                preferred_element_type=jnp.float32) + bk_ref[...]      # (Cq, N)
    v = jnp.dot(wv_ref[...], x_full,
                preferred_element_type=jnp.float32) + bv_ref[...]      # (C, N)
    q_t = jnp.dot(x_q.T, wqT_ref[...],
                  preferred_element_type=jnp.float32) + bq_ref[...]    # (tq, Cq)

    # --- energy[i, j] = sum_c q[c, i] * k[c, j]  -> (tq, N) ---
    energy = jnp.dot(q_t, k, preferred_element_type=jnp.float32)

    # --- softmax over keys (last dim, lane axis) ---
    energy = energy - jnp.max(energy, axis=-1, keepdims=True)
    p = jnp.exp(energy)
    inv_l = pl.reciprocal(jnp.sum(p, axis=-1, keepdims=True), approx=True)
    p = p * inv_l                                            # attention (tq, N)

    # --- out[c, i] = sum_j v[c, j] * attention[i, j]  -> (C, tq) ---
    out = jax.lax.dot_general(v, p, (((1,), (1,)), ((), ())),
                              preferred_element_type=jnp.float32)

    # --- gamma * out + x (residual), lane-dense store ---
    gamma = gamma_ref[...]                                   # (1, 1), broadcasts
    o_ref[...] = (gamma * out + x_q.astype(jnp.float32)).astype(o_ref.dtype)


def _pick_q_tile(n):
    """Pick a lane-dense query tile that divides N; prefer >=2 grid steps."""
    if n % 128 != 0:
        return n                       # block == full dim is always allowed
    for t in (512, 256, 128):
        if n % t == 0 and n // t >= 2:
            return t
    return 128


def self_attn_pallas(x, params):
    """x: (B, C, W, H) float32.  params: dict of Self_Attn parameters."""
    B, C, Wd, Hd = x.shape
    N = Wd * Hd
    x2 = x.reshape(B, C, N)            # flatten spatial -> lane-dense layout

    wq, bq = params["wq"], params["bq"]            # (Cq, C), (Cq,)
    wk, bk = params["wk"], params["bk"]            # (Cq, C), (Cq,)
    wv, bv = params["wv"], params["bv"]            # (C, C),  (C,)
    gamma = params["gamma"]                        # (1,)
    Cq = wq.shape[0]

    tq = _pick_q_tile(N)
    assert N % tq == 0
    grid = (B, N // tq)

    # Parameter glue (pure layout, outside the kernel).
    wqT = wq.T                                     # (C, Cq)
    bq_row = bq.reshape(1, Cq)
    bk_col = bk.reshape(Cq, 1)
    bv_col = bv.reshape(C, 1)
    gamma2 = gamma.reshape(1, 1).astype(jnp.float32)

    kernel = functools.partial(_self_attn_kernel, tq=tq)

    out = pl.pallas_call(
        kernel,
        out_shape=jax.ShapeDtypeStruct((B, C, N), x.dtype),
        grid=grid,
        in_specs=[
            # Full (C, N) slab: index_map constant in qi -> VMEM-resident
            # across the query-tile axis, re-DMAed only when b changes.
            pl.BlockSpec((None, C, N), lambda b, qi: (b, 0, 0)),
            # Weights / biases / gamma: constant index maps -> DMAed once.
            pl.BlockSpec((C, Cq), lambda b, qi: (0, 0)),
            pl.BlockSpec((Cq, C), lambda b, qi: (0, 0)),
            pl.BlockSpec((C, C), lambda b, qi: (0, 0)),
            pl.BlockSpec((1, Cq), lambda b, qi: (0, 0)),
            pl.BlockSpec((Cq, 1), lambda b, qi: (0, 0)),
            pl.BlockSpec((C, 1), lambda b, qi: (0, 0)),
            pl.BlockSpec((1, 1), lambda b, qi: (0, 0)),
        ],
        # Lane-dense output tiles: last dim tq (multiple of 128, or full N).
        out_specs=pl.BlockSpec((None, C, tq), lambda b, qi: (b, 0, qi)),
        compiler_params=pltpu.CompilerParams(
            dimension_semantics=("parallel", "parallel")),
    )(x2, wqT, wk, wv, bq_row, bk_col, bv_col, gamma2)

    return out.reshape(B, C, Wd, Hd)


def self_attn_reference(x, params):
    """Pure-JAX reference mirroring the PyTorch forward."""
    B, C, Wd, Hd = x.shape
    N = Wd * Hd
    xf = x.reshape(B, C, N)
    hp = jax.lax.Precision.HIGHEST
    q = jnp.einsum('oc,bcn->bon', params["wq"], xf, precision=hp) \
        + params["bq"][None, :, None]                        # (B, Cq, N)
    k = jnp.einsum('oc,bcn->bon', params["wk"], xf, precision=hp) \
        + params["bk"][None, :, None]                        # (B, Cq, N)
    v = jnp.einsum('oc,bcn->bon', params["wv"], xf, precision=hp) \
        + params["bv"][None, :, None]                        # (B, C, N)
    energy = jnp.einsum('bci,bcj->bij', q, k, precision=hp)  # (B, N, N)
    attention = jax.nn.softmax(energy, axis=-1)
    out = jnp.einsum('bcj,bij->bci', v, attention, precision=hp)  # (B, C, N)
    out = out.reshape(B, C, Wd, Hd)
    return params["gamma"][0] * out + x


def make_params(key, in_dim):
    # PyTorch inits gamma = 0; we use a nonzero value so the attention path is
    # actually exercised by the test.
    cq = max(1, in_dim // 8)
    ks = jax.random.split(key, 7)
    return {
        "wq": 0.15 * jax.random.normal(ks[0], (cq, in_dim), jnp.float32),
        "bq": 0.05 * jax.random.normal(ks[1], (cq,), jnp.float32),
        "wk": 0.15 * jax.random.normal(ks[2], (cq, in_dim), jnp.float32),
        "bk": 0.05 * jax.random.normal(ks[3], (cq,), jnp.float32),
        "wv": 0.20 * jax.random.normal(ks[4], (in_dim, in_dim), jnp.float32),
        "bv": 0.05 * jax.random.normal(ks[5], (in_dim,), jnp.float32),
        "gamma": 0.7 + 0.1 * jax.random.normal(ks[6], (1,), jnp.float32),
    }


if __name__ == "__main__":
    key = jax.random.PRNGKey(0)
    k_x, k_p = jax.random.split(key)

    # in_dim must be >= 8 so in_dim // 8 >= 1 (as in the PyTorch module).
    B, C, Wd, Hd = 2, 32, 16, 16          # N = W*H = 256 (lane-dense)
    x = jax.random.normal(k_x, (B, C, Wd, Hd), jnp.float32)
    params = make_params(k_p, in_dim=C)

    out = jax.block_until_ready(self_attn_pallas(x, params))
    ref = jax.block_until_ready(self_attn_reference(x, params))

    assert out.shape == (B, C, Wd, Hd)
    max_diff = jnp.max(jnp.abs(out - ref))
    assert jnp.allclose(out, ref, rtol=2e-2, atol=2e-2), \
        f"max abs diff {max_diff}"

    print("KERNEL_OK")
</pallas_src>

<mosaic_0001>
module attributes {stable_mosaic.version = 11 : i64} {
  func.func @_self_attn_kernel(%arg0: i32, %arg1: i32, %arg2: memref<1x32x256xf32, #tpu.memory_space<vmem>>, %arg3: memref<32x4xf32, #tpu.memory_space<vmem>>, %arg4: memref<4x32xf32, #tpu.memory_space<vmem>>, %arg5: memref<32x32xf32, #tpu.memory_space<vmem>>, %arg6: memref<1x4xf32, #tpu.memory_space<vmem>>, %arg7: memref<4x1xf32, #tpu.memory_space<vmem>>, %arg8: memref<32x1xf32, #tpu.memory_space<vmem>>, %arg9: memref<1x1xf32, #tpu.memory_space<vmem>>, %arg10: memref<1x32x128xf32, #tpu.memory_space<vmem>>) attributes {dimension_semantics = [#tpu.dimension_semantics<parallel>, #tpu.dimension_semantics<parallel>], iteration_bounds = array<i64: 2, 2>, scalar_prefetch = 0 : i64, scratch_operands = 0 : i64, tpu.core_type = #tpu.core_type<tc>, window_params = [{transform_indices = @transform_0, window_bounds = array<i64: 1, 32, 256>}, {pipeline_mode = #tpu.pipeline_mode<synchronous>, transform_indices = @transform_1, window_bounds = array<i64: 32, 4>}, {pipeline_mode = #tpu.pipeline_mode<synchronous>, transform_indices = @transform_2, window_bounds = array<i64: 4, 32>}, {pipeline_mode = #tpu.pipeline_mode<synchronous>, transform_indices = @transform_3, window_bounds = array<i64: 32, 32>}, {pipeline_mode = #tpu.pipeline_mode<synchronous>, transform_indices = @transform_4, window_bounds = array<i64: 1, 4>}, {pipeline_mode = #tpu.pipeline_mode<synchronous>, transform_indices = @transform_5, window_bounds = array<i64: 4, 1>}, {pipeline_mode = #tpu.pipeline_mode<synchronous>, transform_indices = @transform_6, window_bounds = array<i64: 32, 1>}, {pipeline_mode = #tpu.pipeline_mode<synchronous>, transform_indices = @transform_7, window_bounds = array<i64: 1, 1>}, {transform_indices = @transform_8, window_bounds = array<i64: 1, 32, 128>}]} {
    %c0 = arith.constant 0 : index
    %c0_0 = arith.constant 0 : index
    %c0_1 = arith.constant 0 : index
    %0 = vector.load %arg2[%c0, %c0_0, %c0_1] : memref<1x32x256xf32, #tpu.memory_space<vmem>>, vector<1x32x256xf32>
    %1 = vector.shape_cast %0 : vector<1x32x256xf32> to vector<32x256xf32>
    %c128_i32 = arith.constant 128 : i32
    %2 = arith.muli %arg1, %c128_i32 : i32
    %3 = tpu.assume_multiple %2, 128 : i32
    %c0_2 = arith.constant 0 : index
    %c0_3 = arith.constant 0 : index
    %4 = arith.index_cast %3 : i32 to index
    %5 = vector.load %arg2[%c0_2, %c0_3, %4] : memref<1x32x256xf32, #tpu.memory_space<vmem>>, vector<1x32x128xf32>
    %6 = vector.shape_cast %5 : vector<1x32x128xf32> to vector<32x128xf32>
    %c0_4 = arith.constant 0 : index
    %c0_5 = arith.constant 0 : index
    %7 = vector.load %arg4[%c0_4, %c0_5] : memref<4x32xf32, #tpu.memory_space<vmem>>, vector<4x32xf32>
    %cst = arith.constant dense<0.000000e+00> : vector<4x256xf32>
    %8 = tpu.matmul %7, %1, %cst {dimension_numbers = #tpu.dot_dimension_numbers<[1], [0], [0], [1], [0, 0, 1, 1], [], []>} : vector<4x32xf32>, vector<32x256xf32>, vector<4x256xf32> -> vector<4x256xf32>
    %c0_6 = arith.constant 0 : index
    %c0_7 = arith.constant 0 : index
    %9 = vector.load %arg7[%c0_6, %c0_7] : memref<4x1xf32, #tpu.memory_space<vmem>>, vector<4x1xf32>
    %10 = vector.broadcast %9 : vector<4x1xf32> to vector<4x256xf32>
    %11 = arith.addf %8, %10 : vector<4x256xf32>
    %c0_8 = arith.constant 0 : index
    %c0_9 = arith.constant 0 : index
    %12 = vector.load %arg5[%c0_8, %c0_9] : memref<32x32xf32, #tpu.memory_space<vmem>>, vector<32x32xf32>
    %cst_10 = arith.constant dense<0.000000e+00> : vector<32x256xf32>
    %13 = tpu.matmul %12, %1, %cst_10 {dimension_numbers = #tpu.dot_dimension_numbers<[1], [0], [0], [1], [0, 0, 1, 1], [], []>} : vector<32x32xf32>, vector<32x256xf32>, vector<32x256xf32> -> vector<32x256xf32>
    %c0_11 = arith.constant 0 : index
    %c0_12 = arith.constant 0 : index
    %14 = vector.load %arg8[%c0_11, %c0_12] : memref<32x1xf32, #tpu.memory_space<vmem>>, vector<32x1xf32>
    %15 = vector.broadcast %14 : vector<32x1xf32> to vector<32x256xf32>
    %16 = arith.addf %13, %15 : vector<32x256xf32>
    %17 = tpu.transpose %6, [1, 0] : vector<32x128xf32> -> vector<128x32xf32>
    %c0_13 = arith.constant 0 : index
    %c0_14 = arith.constant 0 : index
    %18 = vector.load %arg3[%c0_13, %c0_14] : memref<32x4xf32, #tpu.memory_space<vmem>>, vector<32x4xf32>
    %cst_15 = arith.constant dense<0.000000e+00> : vector<128x4xf32>
    %19 = tpu.matmul %17, %18, %cst_15 {dimension_numbers = #tpu.dot_dimension_numbers<[1], [0], [0], [1], [0, 0, 1, 1], [], []>} : vector<128x32xf32>, vector<32x4xf32>, vector<128x4xf32> -> vector<128x4xf32>
    %c0_16 = arith.constant 0 : index
    %c0_17 = arith.constant 0 : index
    %20 = vector.load %arg6[%c0_16, %c0_17] : memref<1x4xf32, #tpu.memory_space<vmem>>, vector<1x4xf32>
    %21 = vector.broadcast %20 : vector<1x4xf32> to vector<128x4xf32>
    %22 = arith.addf %19, %21 : vector<128x4xf32>
    %cst_18 = arith.constant dense<0.000000e+00> : vector<128x256xf32>
    %23 = tpu.matmul %22, %11, %cst_18 {dimension_numbers = #tpu.dot_dimension_numbers<[1], [0], [0], [1], [0, 0, 1, 1], [], []>} : vector<128x4xf32>, vector<4x256xf32>, vector<128x256xf32> -> vector<128x256xf32>
    %cst_19 = arith.constant dense<0xFF800000> : vector<128xf32>
    %24 = vector.multi_reduction <maximumf>, %23, %cst_19 [1] : vector<128x256xf32> to vector<128xf32>
    %25 = vector.shape_cast %24 : vector<128xf32> to vector<128x1xf32>
    %26 = vector.broadcast %25 : vector<128x1xf32> to vector<128x256xf32>
    %27 = arith.subf %23, %26 : vector<128x256xf32>
    %28 = math.exp %27 : vector<128x256xf32>
    %cst_20 = arith.constant dense<0.000000e+00> : vector<128xf32>
    %29 = vector.multi_reduction <add>, %28, %cst_20 [1] : vector<128x256xf32> to vector<128xf32>
    %30 = vector.shape_cast %29 : vector<128xf32> to vector<128x1xf32>
    %31 = tpu.reciprocal %30 {approx = true} : vector<128x1xf32> -> vector<128x1xf32>
    %32 = vector.broadcast %31 : vector<128x1xf32> to vector<128x256xf32>
    %33 = arith.mulf %28, %32 : vector<128x256xf32>
    %cst_21 = arith.constant dense<0.000000e+00> : vector<32x128xf32>
    %34 = tpu.matmul %16, %33, %cst_21 {dimension_numbers = #tpu.dot_dimension_numbers<[1], [1], [0], [0], [0, 0, 1, 0], [], []>} : vector<32x256xf32>, vector<128x256xf32>, vector<32x128xf32> -> vector<32x128xf32>
    %c0_22 = arith.constant 0 : index
    %c0_23 = arith.constant 0 : index
    %35 = vector.load %arg9[%c0_22, %c0_23] : memref<1x1xf32, #tpu.memory_space<vmem>>, vector<1x1xf32>
    %36 = vector.broadcast %35 : vector<1x1xf32> to vector<32x128xf32>
    %37 = arith.mulf %36, %34 : vector<32x128xf32>
    %38 = arith.addf %37, %6 : vector<32x128xf32>
    %c0_24 = arith.constant 0 : index
    %c0_25 = arith.constant 0 : index
    %c0_26 = arith.constant 0 : index
    %39 = vector.load %arg10[%c0_24, %c0_25, %c0_26] : memref<1x32x128xf32, #tpu.memory_space<vmem>>, vector<1x32x128xf32>
    %40 = vector.shape_cast %39 : vector<1x32x128xf32> to vector<32x128xf32>
    %41 = vector.shape_cast %38 : vector<32x128xf32> to vector<1x32x128xf32>
    tpu.vector_store %arg10[%c0_24, %c0_25, %c0_26], %41 {strides = array<i32>} : memref<1x32x128xf32, #tpu.memory_space<vmem>>, vector<1x32x128xf32>,
    return
  }
  func.func @transform_0(%arg0: i32, %arg1: i32) -> (i32, i32, i32) {
    %c0_i32 = arith.constant 0 : i32
    %c0_i32_0 = arith.constant 0 : i32
    %c0_i32_1 = arith.constant 0 : i32
    return %arg0, %c0_i32, %c0_i32_0 : i32, i32, i32
  }
  func.func @transform_1(%arg0: i32, %arg1: i32) -> (i32, i32) {
    %c0_i32 = arith.constant 0 : i32
    %c0_i32_0 = arith.constant 0 : i32
    %c0_i32_1 = arith.constant 0 : i32
    return %c0_i32, %c0_i32_0 : i32, i32
  }
  func.func @transform_2(%arg0: i32, %arg1: i32) -> (i32, i32) {
    %c0_i32 = arith.constant 0 : i32
    %c0_i32_0 = arith.constant 0 : i32
    %c0_i32_1 = arith.constant 0 : i32
    return %c0_i32, %c0_i32_0 : i32, i32
  }
  func.func @transform_3(%arg0: i32, %arg1: i32) -> (i32, i32) {
    %c0_i32 = arith.constant 0 : i32
    %c0_i32_0 = arith.constant 0 : i32
    %c0_i32_1 = arith.constant 0 : i32
    return %c0_i32, %c0_i32_0 : i32, i32
  }
  func.func @transform_4(%arg0: i32, %arg1: i32) -> (i32, i32) {
    %c0_i32 = arith.constant 0 : i32
    %c0_i32_0 = arith.constant 0 : i32
    %c0_i32_1 = arith.constant 0 : i32
    return %c0_i32, %c0_i32_0 : i32, i32
  }
  func.func @transform_5(%arg0: i32, %arg1: i32) -> (i32, i32) {
    %c0_i32 = arith.constant 0 : i32
    %c0_i32_0 = arith.constant 0 : i32
    %c0_i32_1 = arith.constant 0 : i32
    return %c0_i32, %c0_i32_0 : i32, i32
  }
  func.func @transform_6(%arg0: i32, %arg1: i32) -> (i32, i32) {
    %c0_i32 = arith.constant 0 : i32
    %c0_i32_0 = arith.constant 0 : i32
    %c0_i32_1 = arith.constant 0 : i32
    return %c0_i32, %c0_i32_0 : i32, i32
  }
  func.func @transform_7(%arg0: i32, %arg1: i32) -> (i32, i32) {
    %c0_i32 = arith.constant 0 : i32
    %c0_i32_0 = arith.constant 0 : i32
    %c0_i32_1 = arith.constant 0 : i32
    return %c0_i32, %c0_i32_0 : i32, i32
  }
  func.func @transform_8(%arg0: i32, %arg1: i32) -> (i32, i32, i32) {
    %c0_i32 = arith.constant 0 : i32
    %c0_i32_0 = arith.constant 0 : i32
    return %arg0, %c0_i32, %arg1 : i32, i32, i32
  }
}

</mosaic_0001>

<llo_original>
// kernel: tpu_custom_call.1
$region0: #{tpu_custom_call.1}
  #allocation0 [shape = 'u32[]', space=smem, size = 0x4, offset = 0x4, fixed_abs, tag = 'smem constant byte address 0x4 - core index']
  #allocation1 [shape = 'u32[72,128]{1,0:T(1,128)}', space=vmem, size = 0x9000, scoped, tag = 'internal scratch']
  #allocation2 [shape = 'f32[1,1]{1,0:T(1,128)S(1)}', space=vmem, size = 0x200, scoped, tag = 'scoped memory for tpu_custom_call.1']
  %s0 = inlined_call_operand.hbm [shape: f32[2,32,256], index: 0, kind: input, shape index: {}]
  %s1 = inlined_call_operand.vmem [shape: f32[32,4], index: 1, kind: input, shape index: {}]
  %s2 = inlined_call_operand.vmem [shape: f32[4,32], index: 2, kind: input, shape index: {}]
  %s3 = inlined_call_operand.vmem [shape: f32[32,32], index: 3, kind: input, shape index: {}]
  %s4 = inlined_call_operand.vmem [shape: f32[1,4], index: 4, kind: input, shape index: {}]
  %s5 = inlined_call_operand.vmem [shape: f32[4,1], index: 5, kind: input, shape index: {}]
  %s6 = inlined_call_operand.vmem [shape: f32[32,1], index: 6, kind: input, shape index: {}]
  %s7 = inlined_call_operand.<no memory space> [shape: f32[1,1], index: 7, kind: input, shape index: {}]
  %s8 = inlined_call_operand.hbm [shape: f32[2,32,256], index: 8, kind: output, shape index: {}]
  %s9 = sld [smem:[#allocation0]]
  $region69: #{tpu_custom_call.1} parent=0
    _
  %s11 = ssub.s32 1, %s9
  %s12 = scalar_select 0, %s11, %s9
  %v13 = vstv %s7
  %14 = vst [vmem:[#allocation2] sm:$0x1] %v13
  $region1: #{tpu_custom_call.1} parent=0
    #allocation3 [shape = 'u8[65536]{0}', space=vmem, size = 0x10000, scoped, tag = 'input window, operand 0']
    #allocation4 [shape = 's32[2]{0}', space=sflag, size = 0x8, scoped, tag = 'scoped memory for tpu_custom_call.1']
    #allocation5 [shape = 's32[2]{0}', space=sflag, size = 0x8, scoped, tag = 'scoped memory for tpu_custom_call.1']
    #allocation6 [shape = 'u8[32768]{0}', space=vmem, size = 0x8000, scoped, tag = 'output window, operand 0']
    %15 = vsyncpa [#allocation4], 0
    %s16 = scalar_lea.sflag [#allocation4], 1
    %17 = vsyncpa %s16, 0
    %18 = vsyncpa [#allocation5], 0
    %s19 = scalar_lea.sflag [#allocation5], 1
    %20 = vsyncpa %s19, 0
    loop: start=0, step=1, limit=6
    $region2: #{tpu_custom_call.1} parent=1 // loop_pre_header
      _
    $region3: #{tpu_custom_call.1} parent=1 // loop_header
      %s22 = sphi 0, %s26
      %p23 = scmp.ge.s32.totalorder %s22, 6
      %s29 = sphi 0, %s41
      %s30 = sphi 0, %s37
      %s31 = sphi 0, %s29
      %s32 = sphi 0, %s30
      %s33 = sphi 0, %s31
      %s34 = sphi 0, %s32
      %s44 = sphi 0, %s46
      %s47 = sphi 0, %s44
      %s48 = sphi 0, %s47
      %s64 = sphi 0, %s48
      %s68 = sphi 0, %s68
      %s70 = sphi 0, %s68
      %s71 = sphi 0, %s70
      %s85 = sphi 0, %s71
      %s89 = sphi 0, %s89
      %s91 = sphi 0, %s89
      %s92 = sphi 0, %s91
      %s106 = sphi 0, %s92
      %s110 = sphi 0, %s110
      %s112 = sphi 0, %s110
      %s113 = sphi 0, %s112
      %s127 = sphi 0, %s113
      %s131 = sphi 0, %s131
      %s133 = sphi 0, %s131
      %s134 = sphi 0, %s133
      %s148 = sphi 0, %s134
      %s152 = sphi 0, %s152
      %s154 = sphi 0, %s152
      %s155 = sphi 0, %s154
      %s169 = sphi 0, %s155
      %s173 = sphi 0, %s173
      %s175 = sphi 0, %s173
      %s176 = sphi 0, %s175
      %s190 = sphi 0, %s176
      %s194 = sphi 0, %s194
      %s196 = sphi 0, %s194
      %s197 = sphi 0, %s196
      %s211 = sphi 0, %s197
      %s219 = sphi 0, %s221
      %s222 = sphi 0, %s219
      %s223 = sphi 0, %s222
      %s239 = sphi 0, %s223
    $region4: #{tpu_custom_call.1} parent=1 // loop_header_branch
      %25 = sbr.rel (%p23) target = $region8
    $region5: #{tpu_custom_call.1} parent=1 // loop_body
      %s27 = ssub.s32 %s22, 1
      %s28 = ssub.s32 %s22, 2
      %s35 = sadd.s32 1, %s30
      %p36 = scmp.ge.s32.totalorder %s35, 2
      %s37 = scalar_select %p36, 0, %s35
      %s38 = sadd.s32 1, %s29
      %s39 = scalar_select %p36, %s38, %s29
      %p40 = scmp.ge.s32.totalorder %s39, 2
      %s41 = scalar_select %p40, 0, %s39
      %s42 = ssub.s32 %s29, %s41
      %p43 = scmp.eq.s32.totalorder %s42, 0
      %s45 = sadd.s32 %s44, 1
      %s46 = scalar_select %p43, %s44, %s45
      %p49 = pneg %p43
      %p50 = scmp.eq.s32.totalorder %s22, 3
      %p51 = por %p49, %p50
      %p52 = scmp.ne.s32.totalorder %s44, %s47
      %p53 = scmp.eq.s32.totalorder %s22, 0
      %p54 = por %p52, %p53
      %p55 = scmp.ne.s32.totalorder %s44, %s47
      %p56 = scmp.eq.s32.totalorder %s27, 3
      %p57 = por %p55, %p56
      %p58 = scmp.ne.s32.totalorder %s47, %s48
      %p59 = scmp.eq.s32.totalorder %s27, 0
      %p60 = por %p58, %p59
      %p61 = scmp.ne.s32.totalorder %s47, %s48
      %p62 = scmp.eq.s32.totalorder %s28, 3
      %p63 = por %p61, %p62
      %p65 = scmp.ne.s32.totalorder %s48, %s64
      %p66 = scmp.eq.s32.totalorder %s28, 0
      %p67 = por %p65, %p66
      %s69 = sadd.s32 %s68, 1
      %p72 = scmp.eq.s32.totalorder %s22, 3
      %p73 = scmp.ne.s32.totalorder %s68, %s70
      %p74 = scmp.eq.s32.totalorder %s22, 0
      %p75 = por %p73, %p74
      %p76 = scmp.ne.s32.totalorder %s68, %s70
      %p77 = scmp.eq.s32.totalorder %s27, 3
      %p78 = por %p76, %p77
      %p79 = scmp.ne.s32.totalorder %s70, %s71
      %p80 = scmp.eq.s32.totalorder %s27, 0
      %p81 = por %p79, %p80
      %p82 = scmp.ne.s32.totalorder %s70, %s71
      %p83 = scmp.eq.s32.totalorder %s28, 3
      %p84 = por %p82, %p83
      %p86 = scmp.ne.s32.totalorder %s71, %s85
      %p87 = scmp.eq.s32.totalorder %s28, 0
      %p88 = por %p86, %p87
      %s90 = sadd.s32 %s89, 1
      %p93 = scmp.eq.s32.totalorder %s22, 3
      %p94 = scmp.ne.s32.totalorder %s89, %s91
      %p95 = scmp.eq.s32.totalorder %s22, 0
      %p96 = por %p94, %p95
      %p97 = scmp.ne.s32.totalorder %s89, %s91
      %p98 = scmp.eq.s32.totalorder %s27, 3
      %p99 = por %p97, %p98
      %p100 = scmp.ne.s32.totalorder %s91, %s92
      %p101 = scmp.eq.s32.totalorder %s27, 0
      %p102 = por %p100, %p101
      %p103 = scmp.ne.s32.totalorder %s91, %s92
      %p104 = scmp.eq.s32.totalorder %s28, 3
      %p105 = por %p103, %p104
      %p107 = scmp.ne.s32.totalorder %s92, %s106
      %p108 = scmp.eq.s32.totalorder %s28, 0
      %p109 = por %p107, %p108
      %s111 = sadd.s32 %s110, 1
      %p114 = scmp.eq.s32.totalorder %s22, 3
      %p115 = scmp.ne.s32.totalorder %s110, %s112
      %p116 = scmp.eq.s32.totalorder %s22, 0
      %p117 = por %p115, %p116
      %p118 = scmp.ne.s32.totalorder %s110, %s112
      %p119 = scmp.eq.s32.totalorder %s27, 3
      %p120 = por %p118, %p119
      %p121 = scmp.ne.s32.totalorder %s112, %s113
      %p122 = scmp.eq.s32.totalorder %s27, 0
      %p123 = por %p121, %p122
      %p124 = scmp.ne.s32.totalorder %s112, %s113
      %p125 = scmp.eq.s32.totalorder %s28, 3
      %p126 = por %p124, %p125
      %p128 = scmp.ne.s32.totalorder %s113, %s127
      %p129 = scmp.eq.s32.totalorder %s28, 0
      %p130 = por %p128, %p129
      %s132 = sadd.s32 %s131, 1
      %p135 = scmp.eq.s32.totalorder %s22, 3
      %p136 = scmp.ne.s32.totalorder %s131, %s133
      %p137 = scmp.eq.s32.totalorder %s22, 0
      %p138 = por %p136, %p137
      %p139 = scmp.ne.s32.totalorder %s131, %s133
      %p140 = scmp.eq.s32.totalorder %s27, 3
      %p141 = por %p139, %p140
      %p142 = scmp.ne.s32.totalorder %s133, %s134
      %p143 = scmp.eq.s32.totalorder %s27, 0
      %p144 = por %p142, %p143
      %p145 = scmp.ne.s32.totalorder %s133, %s134
      %p146 = scmp.eq.s32.totalorder %s28, 3
      %p147 = por %p145, %p146
      %p149 = scmp.ne.s32.totalorder %s134, %s148
      %p150 = scmp.eq.s32.totalorder %s28, 0
      %p151 = por %p149, %p150
      %s153 = sadd.s32 %s152, 1
      %p156 = scmp.eq.s32.totalorder %s22, 3
      %p157 = scmp.ne.s32.totalorder %s152, %s154
      %p158 = scmp.eq.s32.totalorder %s22, 0
      %p159 = por %p157, %p158
      %p160 = scmp.ne.s32.totalorder %s152, %s154
      %p161 = scmp.eq.s32.totalorder %s27, 3
      %p162 = por %p160, %p161
      %p163 = scmp.ne.s32.totalorder %s154, %s155
      %p164 = scmp.eq.s32.totalorder %s27, 0
      %p165 = por %p163, %p164
      %p166 = scmp.ne.s32.totalorder %s154, %s155
      %p167 = scmp.eq.s32.totalorder %s28, 3
      %p168 = por %p166, %p167
      %p170 = scmp.ne.s32.totalorder %s155, %s169
      %p171 = scmp.eq.s32.totalorder %s28, 0
      %p172 = por %p170, %p171
      %s174 = sadd.s32 %s173, 1
      %p177 = scmp.eq.s32.totalorder %s22, 3
      %p178 = scmp.ne.s32.totalorder %s173, %s175
      %p179 = scmp.eq.s32.totalorder %s22, 0
      %p180 = por %p178, %p179
      %p181 = scmp.ne.s32.totalorder %s173, %s175
      %p182 = scmp.eq.s32.totalorder %s27, 3
      %p183 = por %p181, %p182
      %p184 = scmp.ne.s32.totalorder %s175, %s176
      %p185 = scmp.eq.s32.totalorder %s27, 0
      %p186 = por %p184, %p185
      %p187 = scmp.ne.s32.totalorder %s175, %s176
      %p188 = scmp.eq.s32.totalorder %s28, 3
      %p189 = por %p187, %p188
      %p191 = scmp.ne.s32.totalorder %s176, %s190
      %p192 = scmp.eq.s32.totalorder %s28, 0
      %p193 = por %p191, %p192
      %s195 = sadd.s32 %s194, 1
      %p198 = scmp.eq.s32.totalorder %s22, 3
      %p199 = scmp.ne.s32.totalorder %s194, %s196
      %p200 = scmp.eq.s32.totalorder %s22, 0
      %p201 = por %p199, %p200
      %p202 = scmp.ne.s32.totalorder %s194, %s196
      %p203 = scmp.eq.s32.totalorder %s27, 3
      %p204 = por %p202, %p203
      %p205 = scmp.ne.s32.totalorder %s196, %s197
      %p206 = scmp.eq.s32.totalorder %s27, 0
      %p207 = por %p205, %p206
      %p208 = scmp.ne.s32.totalorder %s196, %s197
      %p209 = scmp.eq.s32.totalorder %s28, 3
      %p210 = por %p208, %p209
      %p212 = scmp.ne.s32.totalorder %s197, %s211
      %p213 = scmp.eq.s32.totalorder %s28, 0
      %p214 = por %p212, %p213
      %s215 = ssub.s32 %s29, %s41
      %s216 = ssub.s32 %s30, %s37
      %s217 = sor.u32 %s215, %s216
      %p218 = scmp.eq.s32.totalorder %s217, 0
      %s220 = sadd.s32 %s219, 1
      %s221 = scalar_select %p218, %s219, %s220
      %p224 = pneg %p218
      %p225 = scmp.eq.s32.totalorder %s22, 3
      %p226 = por %p224, %p225
      %p227 = scmp.ne.s32.totalorder %s219, %s222
      %p228 = scmp.eq.s32.totalorder %s22, 0
      %p229 = por %p227, %p228
      %p230 = scmp.ne.s32.totalorder %s219, %s222
      %p231 = scmp.eq.s32.totalorder %s27, 3
      %p232 = por %p230, %p231
      %p233 = scmp.ne.s32.totalorder %s222, %s223
      %p234 = scmp.eq.s32.totalorder %s27, 0
      %p235 = por %p233, %p234
      %p236 = scmp.ne.s32.totalorder %s222, %s223
      %p237 = scmp.eq.s32.totalorder %s28, 3
      %p238 = por %p236, %p237
      %p240 = scmp.ne.s32.totalorder %s223, %s239
      %p241 = scmp.eq.s32.totalorder %s28, 0
      %p242 = por %p240, %p241
      %p243 = scmp.le.s32.totalorder 1, %s22
      %p244 = scmp.lt.s32.totalorder %s22, 5
      %p245 = pnand %p243, %p244
      %p246 = pneg %p245
      // Predicated region
      $region9: #{tpu_custom_call.1} parent=5 // pred_check
        _
      $region10: #{tpu_custom_call.1} parent=5 // pred_check_branch
        %248 = sbr.rel (%p245) target = $region12
      $region11: #{tpu_custom_call.1} parent=5 // pred_region
        %s249 = ssub.s32 %s22, 1
        // Predicated region
        $region13: #{tpu_custom_call.1} parent=11 // pred_check
          %p250 = pneg %p81
        $region14: #{tpu_custom_call.1} parent=11 // pred_check_branch
          %252 = sbr.rel (%p250) target = $region16
        $region15: #{tpu_custom_call.1} parent=11 // pred_region
          _
        $region16: #{tpu_custom_call.1} parent=11 // pred_fallthru
          _
        // Predicated region
        $region17: #{tpu_custom_call.1} parent=11 // pred_check
          %p253 = pneg %p102
        $region18: #{tpu_custom_call.1} parent=11 // pred_check_branch
          %255 = sbr.rel (%p253) target = $region20
        $region19: #{tpu_custom_call.1} parent=11 // pred_region
          _
        $region20: #{tpu_custom_call.1} parent=11 // pred_fallthru
          _
        // Predicated region
        $region21: #{tpu_custom_call.1} parent=11 // pred_check
          %p256 = pneg %p123
        $region22: #{tpu_custom_call.1} parent=11 // pred_check_branch
          %258 = sbr.rel (%p256) target = $region24
        $region23: #{tpu_custom_call.1} parent=11 // pred_region
          _
        $region24: #{tpu_custom_call.1} parent=11 // pred_fallthru
          _
        // Predicated region
        $region25: #{tpu_custom_call.1} parent=11 // pred_check
          %p259 = pneg %p144
        $region26: #{tpu_custom_call.1} parent=11 // pred_check_branch
          %261 = sbr.rel (%p259) target = $region28
        $region27: #{tpu_custom_call.1} parent=11 // pred_region
          _
        $region28: #{tpu_custom_call.1} parent=11 // pred_fallthru
          _
        // Predicated region
        $region29: #{tpu_custom_call.1} parent=11 // pred_check
          %p262 = pneg %p165
        $region30: #{tpu_custom_call.1} parent=11 // pred_check_branch
          %264 = sbr.rel (%p262) target = $region32
        $region31: #{tpu_custom_call.1} parent=11 // pred_region
          _
        $region32: #{tpu_custom_call.1} parent=11 // pred_fallthru
          _
        // Predicated region
        $region33: #{tpu_custom_call.1} parent=11 // pred_check
          %p265 = pneg %p186
        $region34: #{tpu_custom_call.1} parent=11 // pred_check_branch
          %267 = sbr.rel (%p265) target = $region36
        $region35: #{tpu_custom_call.1} parent=11 // pred_region
          _
        $region36: #{tpu_custom_call.1} parent=11 // pred_fallthru
          _
        // Predicated region
        $region37: #{tpu_custom_call.1} parent=11 // pred_check
          %p268 = pneg %p207
        $region38: #{tpu_custom_call.1} parent=11 // pred_check_branch
          %270 = sbr.rel (%p268) target = $region40
        $region39: #{tpu_custom_call.1} parent=11 // pred_region
          _
        $region40: #{tpu_custom_call.1} parent=11 // pred_fallthru
          _
      $region12: #{tpu_custom_call.1} parent=5 // pred_fallthru
        _
      %p271 = scmp.lt.s32.totalorder %s22, 4
      // Predicated region
      $region41: #{tpu_custom_call.1} parent=5 // pred_check
        %p272 = pneg %p271
      $region42: #{tpu_custom_call.1} parent=5 // pred_check_branch
        %274 = sbr.rel (%p272) target = $region44
      $region43: #{tpu_custom_call.1} parent=5 // pred_region
        // Predicated region
        $region45: #{tpu_custom_call.1} parent=43 // pred_check
          %p275 = pneg %p54
        $region46: #{tpu_custom_call.1} parent=43 // pred_check_branch
          %277 = sbr.rel (%p275) target = $region48
        $region47: #{tpu_custom_call.1} parent=43 // pred_region
          %s278 = sand.u32 %s44, 1
          %s279 = scalar_lea.sflag [#allocation4], %s278
          %s280 = sand.u32 %s44, 1
          %s281 = smul.addr %s280, 64
          %s282 = scalar_lea.vmem [#allocation3], %s281
          %284 = vsyncadd %s279, 0
          %s285 = smul.addr %s29, 8
          %s286 = smul.addr %s285, 8
          %s287 = scalar_lea.hbm %s0, %s286
          %s288 = sshll.u32 %s287, 4
          %s289 = int_to_ptr.hbm [resolvable:$true] %s288
          %s290 = sshll.u32 %s282, 4
          %s291 = int_to_ptr.vmem [resolvable:$true] %s290
          %296 = dma.hbm_to_vmem [thread:$0]  %s289, 1024, %s291, %s279, 256, 256, 16
        $region48: #{tpu_custom_call.1} parent=43 // pred_fallthru
          _
      $region44: #{tpu_custom_call.1} parent=5 // pred_fallthru
        _
      %p297 = scmp.le.s32.totalorder 1, %s22
      %p298 = scmp.lt.s32.totalorder %s22, 5
      %p299 = pnand %p297, %p298
      %p300 = pneg %p299
      // Predicated region
      $region49: #{tpu_custom_call.1} parent=5 // pred_check
        _
      $region50: #{tpu_custom_call.1} parent=5 // pred_check_branch
        %302 = sbr.rel (%p299) target = $region52
      $region51: #{tpu_custom_call.1} parent=5 // pred_region
        %s303 = ssub.s32 %s22, 1
        %s304 = sand.u32 %s47, 1
        %s305 = scalar_lea.sflag [#allocation4], %s304
        %s306 = sand.u32 %s47, 1
        %s307 = smul.addr %s306, 64
        %s308 = scalar_lea.vmem [#allocation3], %s307
        // Predicated region
        $region53: #{tpu_custom_call.1} parent=51 // pred_check
          %p309 = pneg %p60
        $region54: #{tpu_custom_call.1} parent=51 // pred_check_branch
          %311 = sbr.rel (%p309) target = $region56
        $region55: #{tpu_custom_call.1} parent=51 // pred_region
          %313 = dma.done %s305, 1024
        $region56: #{tpu_custom_call.1} parent=51 // pred_fallthru
          _
        %s314 = sand.u32 %s47, 1
        %s315 = scalar_lea.sflag [#allocation4], %s314
        %s316 = sand.u32 %s47, 1
        %s317 = smul.addr %s316, 64
        %s318 = scalar_lea.vmem [#allocation3], %s317
        %p319 = pneg %p60
        %p320 = pneg %p57
        %p321 = pneg %p81
        %p322 = pneg %p78
        %p323 = pneg %p102
        %p324 = pneg %p99
        %p325 = pneg %p123
        %p326 = pneg %p120
        %p327 = pneg %p144
        %p328 = pneg %p141
        %p329 = pneg %p165
        %p330 = pneg %p162
        %p331 = pneg %p186
        %p332 = pneg %p183
        %p333 = pneg %p207
        %p334 = pneg %p204
        %p335 = pneg %p235
        %p336 = pneg %p232
        %s337 = sand.u32 %s222, 1
        %s338 = scalar_lea.sflag [#allocation5], %s337
        %s339 = sand.u32 %s222, 1
        %s340 = smul.addr %s339, 32
        %s341 = scalar_lea.vmem [#allocation6], %s340
        %v342 = vld [vmem:[%s308] sm:$0xff]
        %v343 = vld [vmem:[%s308 + $0x8] sm:$0xff]
        %v344 = vld [vmem:[%s308 + $0x10] sm:$0xff]
        %v345 = vld [vmem:[%s308 + $0x18] sm:$0xff]
        %v346 = vld [vmem:[%s308 + $0x20] sm:$0xff]
        %v347 = vld [vmem:[%s308 + $0x28] sm:$0xff]
        %v348 = vld [vmem:[%s308 + $0x30] sm:$0xff]
        %v349 = vld [vmem:[%s308 + $0x38] sm:$0xff]
        %s350 = smul.u32 %s32, 128
        %s351 = sshra.s32 %s350, 7
        %s352 = sand.u32 %s350, 127
        %s353 = smul.addr %s351, 8
        %s354 = scalar_lea.vmem %s308, %s353 [#allocation3]
        %v355 = vld [vmem:[%s354] sm:$0xff]
        %v356 = vld [vmem:[%s354 + $0x10] sm:$0xff]
        %v357 = vld [vmem:[%s354 + $0x20] sm:$0xff]
        %v358 = vld [vmem:[%s354 + $0x30] sm:$0xff]
        %v359 = vld [vmem:[%s2] sm:$0xf]
        %v360 = vld [vmem:[%s5] sm:$0xf]
        %362 = vset.pattern.permute.xlu0 0
        %363 = vperm.xlu0 %362, %v360
        %v364 = vpop.permute.xlu0 %363
        %vm366 = vcmask 261120
        %v368 = vsel %vm366, %v359, 0
        %370 = vmatpush.msra.mxu0 0.0
        %371 = vmatpush.msra.mxu0 0.0
        %372 = vmatpush.msra.mxu0 0.0
        %373 = vmatpush.msra.mxu0 0.0
        %374 = vmatpush.msra.mxu0 0.0
        %375 = vmatpush.msra.mxu0 0.0
        %376 = vmatpush.msra.mxu0 0.0
        %377 = vmatpush.msra.mxu0 0.0
        %378 = vmatpush.msra.mxu0 0.0
        %379 = vmatpush.msra.mxu0 0.0
        %380 = vmatpush.msra.mxu0 0.0
        %381 = vmatpush.msra.mxu0 0.0
        %382 = vmatpush.msra.mxu0 %v348
        %383 = vmatpush.msra.mxu0 %v346
        %384 = vmatpush.msra.mxu0 %v344
        %385 = vmatpush.msra.mxu0 %v342
        %386 = vmatmul.f32.gmra.mxu0 %v368
        %v387 = vpop.f32.mrf.mxu0
        %v388 = vadd.f32 %v364, %v387
        %389 = vdwg.mxu0
        %390 = vmatpush.msra.mxu0 0.0
        %391 = vmatpush.msra.mxu0 0.0
        %392 = vmatpush.msra.mxu0 0.0
        %393 = vmatpush.msra.mxu0 0.0
        %394 = vmatpush.msra.mxu0 0.0
        %395 = vmatpush.msra.mxu0 0.0
        %396 = vmatpush.msra.mxu0 0.0
        %397 = vmatpush.msra.mxu0 0.0
        %398 = vmatpush.msra.mxu0 0.0
        %399 = vmatpush.msra.mxu0 0.0
        %400 = vmatpush.msra.mxu0 0.0
        %401 = vmatpush.msra.mxu0 0.0
        %402 = vmatpush.msra.mxu0 %v349
        %403 = vmatpush.msra.mxu0 %v347
        %404 = vmatpush.msra.mxu0 %v345
        %405 = vmatpush.msra.mxu0 %v343
        %406 = vmatmul.f32.gmra.mxu0 %v368
        %v407 = vpop.f32.mrf.mxu0
        %v408 = vadd.f32 %v364, %v407
        %409 = vdwg.mxu0
        %v410 = vld [vmem:[%s3] sm:$0xff]
        %v411 = vld [vmem:[%s3 + $0x8] sm:$0xff]
        %v412 = vld [vmem:[%s3 + $0x10] sm:$0xff]
        %v413 = vld [vmem:[%s3 + $0x18] sm:$0xff]
        %v414 = vld [vmem:[%s6] sm:$0xff]
        %v415 = vld [vmem:[%s6 + $0x8] sm:$0xff]
        %v416 = vld [vmem:[%s6 + $0x10] sm:$0xff]
        %v417 = vld [vmem:[%s6 + $0x18] sm:$0xff]
        %419 = vset.pattern.permute.xlu0 0
        %420 = vperm.xlu0 %419, %v414
        %v421 = vpop.permute.xlu0 %420
        %424 = vset.pattern.permute.xlu0 0
        %425 = vperm.xlu0 %424, %v415
        %v426 = vpop.permute.xlu0 %425
        %429 = vset.pattern.permute.xlu0 0
        %430 = vperm.xlu0 %429, %v416
        %v431 = vpop.permute.xlu0 %430
        %434 = vset.pattern.permute.xlu0 0
        %435 = vperm.xlu0 %434, %v417
        %v436 = vpop.permute.xlu0 %435
        %v439 = vsel %vm366, %v410, 0
        %v442 = vsel %vm366, %v411, 0
        %v445 = vsel %vm366, %v412, 0
        %v448 = vsel %vm366, %v413, 0
        %450 = vmatpush.msra.mxu0 0.0
        %451 = vmatpush.msra.mxu0 0.0
        %452 = vmatpush.msra.mxu0 0.0
        %453 = vmatpush.msra.mxu0 0.0
        %454 = vmatpush.msra.mxu0 0.0
        %455 = vmatpush.msra.mxu0 0.0
        %456 = vmatpush.msra.mxu0 0.0
        %457 = vmatpush.msra.mxu0 0.0
        %458 = vmatpush.msra.mxu0 0.0
        %459 = vmatpush.msra.mxu0 0.0
        %460 = vmatpush.msra.mxu0 0.0
        %461 = vmatpush.msra.mxu0 0.0
        %462 = vmatpush.msra.mxu0 %v348
        %463 = vmatpush.msra.mxu0 %v346
        %464 = vmatpush.msra.mxu0 %v344
        %465 = vmatpush.msra.mxu0 %v342
        %466 = vmatmul.f32.gmra.mxu0 %v439
        %v467 = vpop.f32.mrf.mxu0
        %v468 = vadd.f32 %v421, %v467
        %469 = vmatmul.f32.gmra.mxu0 %v442
        %v470 = vpop.f32.mrf.mxu0
        %v471 = vadd.f32 %v426, %v470
        %472 = vmatmul.f32.gmra.mxu0 %v445
        %v473 = vpop.f32.mrf.mxu0
        %v474 = vadd.f32 %v431, %v473
        %475 = vmatmul.f32.gmra.mxu0 %v448
        %v476 = vpop.f32.mrf.mxu0
        %v477 = vadd.f32 %v436, %v476
        %478 = vdwg.mxu0
        %479 = vmatpush.msra.mxu0 0.0
        %480 = vmatpush.msra.mxu0 0.0
        %481 = vmatpush.msra.mxu0 0.0
        %482 = vmatpush.msra.mxu0 0.0
        %483 = vmatpush.msra.mxu0 0.0
        %484 = vmatpush.msra.mxu0 0.0
        %485 = vmatpush.msra.mxu0 0.0
        %486 = vmatpush.msra.mxu0 0.0
        %487 = vmatpush.msra.mxu0 0.0
        %488 = vmatpush.msra.mxu0 0.0
        %489 = vmatpush.msra.mxu0 0.0
        %490 = vmatpush.msra.mxu0 0.0
        %491 = vmatpush.msra.mxu0 %v349
        %492 = vmatpush.msra.mxu0 %v347
        %493 = vmatpush.msra.mxu0 %v345
        %494 = vmatpush.msra.mxu0 %v343
        %495 = vmatmul.f32.gmra.mxu0 %v439
        %v496 = vpop.f32.mrf.mxu0
        %v497 = vadd.f32 %v421, %v496
        %498 = vmatmul.f32.gmra.mxu0 %v442
        %v499 = vpop.f32.mrf.mxu0
        %v500 = vadd.f32 %v426, %v499
        %501 = vmatmul.f32.gmra.mxu0 %v445
        %v502 = vpop.f32.mrf.mxu0
        %v503 = vadd.f32 %v431, %v502
        %504 = vmatmul.f32.gmra.mxu0 %v448
        %v505 = vpop.f32.mrf.mxu0
        %v506 = vadd.f32 %v436, %v505
        %507 = vdwg.mxu0
        %508 = vxpose.xlu0.b32.start [1/16] %v355, 128
        %509 = vxpose.xlu0.b32.cont [2/16] %v356, 128
        %510 = vxpose.xlu0.b32.cont [3/16] %v357, 128
        %511 = vxpose.xlu0.b32.cont [4/16] %v358, 128
        %512 = vxpose.xlu0.b32.cont [5/16] 0.0, 128
        %513 = vxpose.xlu0.b32.cont [6/16] 0.0, 128
        %514 = vxpose.xlu0.b32.cont [7/16] 0.0, 128
        %515 = vxpose.xlu0.b32.cont [8/16] 0.0, 128
        %516 = vxpose.xlu0.b32.cont [9/16] 0.0, 128
        %517 = vxpose.xlu0.b32.cont [10/16] 0.0, 128
        %518 = vxpose.xlu0.b32.cont [11/16] 0.0, 128
        %519 = vxpose.xlu0.b32.cont [12/16] 0.0, 128
        %520 = vxpose.xlu0.b32.cont [13/16] 0.0, 128
        %521 = vxpose.xlu0.b32.cont [14/16] 0.0, 128
        %522 = vxpose.xlu0.b32.cont [15/16] 0.0, 128
        %523 = vxpose.xlu0.b32.end [16/16] 0.0, 128
        %v524 = vpop.trf.xlu0
        %v525 = vpop.trf.xlu0
        %v526 = vpop.trf.xlu0
        %v527 = vpop.trf.xlu0
        %v528 = vpop.trf.xlu0
        %v529 = vpop.trf.xlu0
        %v530 = vpop.trf.xlu0
        %v531 = vpop.trf.xlu0
        %v532 = vpop.trf.xlu0
        %v533 = vpop.trf.xlu0
        %v534 = vpop.trf.xlu0
        %v535 = vpop.trf.xlu0
        %v536 = vpop.trf.xlu0
        %v537 = vpop.trf.xlu0
        %v538 = vpop.trf.xlu0
        %v539 = vpop.trf.xlu0
        %v540 = vld [vmem:[%s1] sm:$0xff]
        %v541 = vld [vmem:[%s1 + $0x8] sm:$0xff]
        %v542 = vld [vmem:[%s1 + $0x10] sm:$0xff]
        %v543 = vld [vmem:[%s1 + $0x18] sm:$0xff]
        %v544 = vld [vmem:[%s4] sm:$0x1]
        %v546 = vperm.slane %v544, 0
        %v549 = vsel %vm366, %v524, 0
        %v552 = vsel %vm366, %v525, 0
        %v555 = vsel %vm366, %v526, 0
        %v558 = vsel %vm366, %v527, 0
        %v561 = vsel %vm366, %v528, 0
        %v564 = vsel %vm366, %v529, 0
        %v567 = vsel %vm366, %v530, 0
        %v570 = vsel %vm366, %v531, 0
        %v573 = vsel %vm366, %v532, 0
        %v576 = vsel %vm366, %v533, 0
        %v579 = vsel %vm366, %v534, 0
        %v582 = vsel %vm366, %v535, 0
        %v585 = vsel %vm366, %v536, 0
        %v588 = vsel %vm366, %v537, 0
        %v591 = vsel %vm366, %v538, 0
        %v594 = vsel %vm366, %v539, 0
        %596 = vmatpush.msra.mxu0 0.0
        %597 = vmatpush.msra.mxu0 0.0
        %598 = vmatpush.msra.mxu0 0.0
        %599 = vmatpush.msra.mxu0 0.0
        %600 = vmatpush.msra.mxu0 0.0
        %601 = vmatpush.msra.mxu0 0.0
        %602 = vmatpush.msra.mxu0 0.0
        %603 = vmatpush.msra.mxu0 0.0
        %604 = vmatpush.msra.mxu0 0.0
        %605 = vmatpush.msra.mxu0 0.0
        %606 = vmatpush.msra.mxu0 0.0
        %607 = vmatpush.msra.mxu0 0.0
        %608 = vmatpush.msra.mxu0 %v543
        %609 = vmatpush.msra.mxu0 %v542
        %610 = vmatpush.msra.mxu0 %v541
        %611 = vmatpush.msra.mxu0 %v540
        %612 = vmatmul.f32.gmra.mxu0 %v549
        %v613 = vpop.f32.mrf.mxu0
        %v614 = vadd.f32 %v546, %v613
        %615 = vmatmul.f32.gmra.mxu0 %v552
        %v616 = vpop.f32.mrf.mxu0
        %v617 = vadd.f32 %v546, %v616
        %618 = vmatmul.f32.gmra.mxu0 %v555
        %v619 = vpop.f32.mrf.mxu0
        %v620 = vadd.f32 %v546, %v619
        %621 = vmatmul.f32.gmra.mxu0 %v558
        %v622 = vpop.f32.mrf.mxu0
        %v623 = vadd.f32 %v546, %v622
        %624 = vmatmul.f32.gmra.mxu0 %v561
        %v625 = vpop.f32.mrf.mxu0
        %v626 = vadd.f32 %v546, %v625
        %627 = vmatmul.f32.gmra.mxu0 %v564
        %v628 = vpop.f32.mrf.mxu0
        %v629 = vadd.f32 %v546, %v628
        %630 = vmatmul.f32.gmra.mxu0 %v567
        %v631 = vpop.f32.mrf.mxu0
        %v632 = vadd.f32 %v546, %v631
        %633 = vmatmul.f32.gmra.mxu0 %v570
        %v634 = vpop.f32.mrf.mxu0
        %v635 = vadd.f32 %v546, %v634
        %636 = vmatmul.f32.gmra.mxu0 %v573
        %v637 = vpop.f32.mrf.mxu0
        %v638 = vadd.f32 %v546, %v637
        %639 = vmatmul.f32.gmra.mxu0 %v576
        %v640 = vpop.f32.mrf.mxu0
        %v641 = vadd.f32 %v546, %v640
        %642 = vmatmul.f32.gmra.mxu0 %v579
        %v643 = vpop.f32.mrf.mxu0
        %v644 = vadd.f32 %v546, %v643
        %645 = vmatmul.f32.gmra.mxu0 %v582
        %v646 = vpop.f32.mrf.mxu0
        %v647 = vadd.f32 %v546, %v646
        %648 = vmatmul.f32.gmra.mxu0 %v585
        %v649 = vpop.f32.mrf.mxu0
        %v650 = vadd.f32 %v546, %v649
        %651 = vmatmul.f32.gmra.mxu0 %v588
        %v652 = vpop.f32.mrf.mxu0
        %v653 = vadd.f32 %v546, %v652
        %654 = vmatmul.f32.gmra.mxu0 %v591
        %v655 = vpop.f32.mrf.mxu0
        %v656 = vadd.f32 %v546, %v655
        %657 = vmatmul.f32.gmra.mxu0 %v594
        %v658 = vpop.f32.mrf.mxu0
        %v659 = vadd.f32 %v546, %v658
        %660 = vdwg.mxu0
        %vm661 = vcmask 31744
        %v663 = vsel %vm661, %v614, 0
        %v666 = vsel %vm661, %v617, 0
        %v669 = vsel %vm661, %v620, 0
        %v672 = vsel %vm661, %v623, 0
        %v675 = vsel %vm661, %v626, 0
        %v678 = vsel %vm661, %v629, 0
        %v681 = vsel %vm661, %v632, 0
        %v684 = vsel %vm661, %v635, 0
        %v687 = vsel %vm661, %v638, 0
        %v690 = vsel %vm661, %v641, 0
        %v693 = vsel %vm661, %v644, 0
        %v696 = vsel %vm661, %v647, 0
        %v699 = vsel %vm661, %v650, 0
        %v702 = vsel %vm661, %v653, 0
        %v705 = vsel %vm661, %v656, 0
        %v708 = vsel %vm661, %v659, 0
        %vm710 = vcmask 1043456
        %v712 = vsel %vm710, %v388, 0
        %v715 = vsel %vm710, %v408, 0
        %717 = vmatpush.msra.mxu0 0.0
        %718 = vmatpush.msra.mxu0 0.0
        %719 = vmatpush.msra.mxu0 0.0
        %720 = vmatpush.msra.mxu0 0.0
        %721 = vmatpush.msra.mxu0 0.0
        %722 = vmatpush.msra.mxu0 0.0
        %723 = vmatpush.msra.mxu0 0.0
        %724 = vmatpush.msra.mxu0 0.0
        %725 = vmatpush.msra.mxu0 0.0
        %726 = vmatpush.msra.mxu0 0.0
        %727 = vmatpush.msra.mxu0 0.0
        %728 = vmatpush.msra.mxu0 0.0
        %729 = vmatpush.msra.mxu0 0.0
        %730 = vmatpush.msra.mxu0 0.0
        %731 = vmatpush.msra.mxu0 0.0
        %732 = vmatpush.msra.mxu0 %v712
        %733 = vmatmul.f32.gmra.mxu0 %v663
        %v734 = vpop.f32.mrf.mxu0
        %v735 = vadd.f32 0.0, %v734
        %736 = vmatmul.f32.gmra.mxu0 %v666
        %v737 = vpop.f32.mrf.mxu0
        %v738 = vadd.f32 0.0, %v737
        %739 = vmatmul.f32.gmra.mxu0 %v669
        %v740 = vpop.f32.mrf.mxu0
        %v741 = vadd.f32 0.0, %v740
        %742 = vmatmul.f32.gmra.mxu0 %v672
        %v743 = vpop.f32.mrf.mxu0
        %v744 = vadd.f32 0.0, %v743
        %745 = vmatmul.f32.gmra.mxu0 %v675
        %v746 = vpop.f32.mrf.mxu0
        %v747 = vadd.f32 0.0, %v746
        %748 = vmatmul.f32.gmra.mxu0 %v678
        %v749 = vpop.f32.mrf.mxu0
        %v750 = vadd.f32 0.0, %v749
        %751 = vmatmul.f32.gmra.mxu0 %v681
        %v752 = vpop.f32.mrf.mxu0
        %v753 = vadd.f32 0.0, %v752
        %754 = vmatmul.f32.gmra.mxu0 %v684
        %v755 = vpop.f32.mrf.mxu0
        %v756 = vadd.f32 0.0, %v755
        %757 = vmatmul.f32.gmra.mxu0 %v687
        %v758 = vpop.f32.mrf.mxu0
        %v759 = vadd.f32 0.0, %v758
        %760 = vmatmul.f32.gmra.mxu0 %v690
        %v761 = vpop.f32.mrf.mxu0
        %v762 = vadd.f32 0.0, %v761
        %763 = vmatmul.f32.gmra.mxu0 %v693
        %v764 = vpop.f32.mrf.mxu0
        %v765 = vadd.f32 0.0, %v764
        %766 = vmatmul.f32.gmra.mxu0 %v696
        %v767 = vpop.f32.mrf.mxu0
        %v768 = vadd.f32 0.0, %v767
        %769 = vmatmul.f32.gmra.mxu0 %v699
        %v770 = vpop.f32.mrf.mxu0
        %v771 = vadd.f32 0.0, %v770
        %772 = vmatmul.f32.gmra.mxu0 %v702
        %v773 = vpop.f32.mrf.mxu0
        %v774 = vadd.f32 0.0, %v773
        %775 = vmatmul.f32.gmra.mxu0 %v705
        %v776 = vpop.f32.mrf.mxu0
        %v777 = vadd.f32 0.0, %v776
        %778 = vmatmul.f32.gmra.mxu0 %v708
        %v779 = vpop.f32.mrf.mxu0
        %v780 = vadd.f32 0.0, %v779
        %781 = vdwg.mxu0
        %782 = vmatpush.msra.mxu0 0.0
        %783 = vmatpush.msra.mxu0 0.0
        %784 = vmatpush.msra.mxu0 0.0
        %785 = vmatpush.msra.mxu0 0.0
        %786 = vmatpush.msra.mxu0 0.0
        %787 = vmatpush.msra.mxu0 0.0
        %788 = vmatpush.msra.mxu0 0.0
        %789 = vmatpush.msra.mxu0 0.0
        %790 = vmatpush.msra.mxu0 0.0
        %791 = vmatpush.msra.mxu0 0.0
        %792 = vmatpush.msra.mxu0 0.0
        %793 = vmatpush.msra.mxu0 0.0
        %794 = vmatpush.msra.mxu0 0.0
        %795 = vmatpush.msra.mxu0 0.0
        %796 = vmatpush.msra.mxu0 0.0
        %797 = vmatpush.msra.mxu0 %v715
        %798 = vmatmul.f32.gmra.mxu0 %v663
        %v799 = vpop.f32.mrf.mxu0
        %v800 = vadd.f32 0.0, %v799
        %801 = vmatmul.f32.gmra.mxu0 %v666
        %v802 = vpop.f32.mrf.mxu0
        %v803 = vadd.f32 0.0, %v802
        %804 = vmatmul.f32.gmra.mxu0 %v669
        %v805 = vpop.f32.mrf.mxu0
        %v806 = vadd.f32 0.0, %v805
        %807 = vmatmul.f32.gmra.mxu0 %v672
        %v808 = vpop.f32.mrf.mxu0
        %v809 = vadd.f32 0.0, %v808
        %810 = vmatmul.f32.gmra.mxu0 %v675
        %v811 = vpop.f32.mrf.mxu0
        %v812 = vadd.f32 0.0, %v811
        %813 = vmatmul.f32.gmra.mxu0 %v678
        %v814 = vpop.f32.mrf.mxu0
        %v815 = vadd.f32 0.0, %v814
        %816 = vmatmul.f32.gmra.mxu0 %v681
        %v817 = vpop.f32.mrf.mxu0
        %v818 = vadd.f32 0.0, %v817
        %819 = vmatmul.f32.gmra.mxu0 %v684
        %v820 = vpop.f32.mrf.mxu0
        %v821 = vadd.f32 0.0, %v820
        %822 = vmatmul.f32.gmra.mxu0 %v687
        %v823 = vpop.f32.mrf.mxu0
        %v824 = vadd.f32 0.0, %v823
        %825 = vmatmul.f32.gmra.mxu0 %v690
        %v826 = vpop.f32.mrf.mxu0
        %v827 = vadd.f32 0.0, %v826
        %828 = vmatmul.f32.gmra.mxu0 %v693
        %v829 = vpop.f32.mrf.mxu0
        %v830 = vadd.f32 0.0, %v829
        %831 = vmatmul.f32.gmra.mxu0 %v696
        %v832 = vpop.f32.mrf.mxu0
        %v833 = vadd.f32 0.0, %v832
        %834 = vmatmul.f32.gmra.mxu0 %v699
        %v835 = vpop.f32.mrf.mxu0
        %v836 = vadd.f32 0.0, %v835
        %837 = vmatmul.f32.gmra.mxu0 %v702
        %v838 = vpop.f32.mrf.mxu0
        %v839 = vadd.f32 0.0, %v838
        %840 = vmatmul.f32.gmra.mxu0 %v705
        %v841 = vpop.f32.mrf.mxu0
        %v842 = vadd.f32 0.0, %v841
        %843 = vmatmul.f32.gmra.mxu0 %v708
        %v844 = vpop.f32.mrf.mxu0
        %v845 = vadd.f32 0.0, %v844
        %846 = vdwg.mxu0
        %v847 = vmax.f32 %v735, %v800
        %848 = vmax.xlane.f32.xlu0 %v847
        %v849 = vpop.xlane.xlu0 %848
        %v850 = vmax.f32 %v738, %v803
        %851 = vmax.xlane.f32.xlu0 %v850
        %v852 = vpop.xlane.xlu0 %851
        %v853 = vmax.f32 %v741, %v806
        %854 = vmax.xlane.f32.xlu0 %v853
        %v855 = vpop.xlane.xlu0 %854
        %v856 = vmax.f32 %v744, %v809
        %857 = vmax.xlane.f32.xlu0 %v856
        %v858 = vpop.xlane.xlu0 %857
        %v859 = vmax.f32 %v747, %v812
        %860 = vmax.xlane.f32.xlu0 %v859
        %v861 = vpop.xlane.xlu0 %860
        %v862 = vmax.f32 %v750, %v815
        %863 = vmax.xlane.f32.xlu0 %v862
        %v864 = vpop.xlane.xlu0 %863
        %v865 = vmax.f32 %v753, %v818
        %866 = vmax.xlane.f32.xlu0 %v865
        %v867 = vpop.xlane.xlu0 %866
        %v868 = vmax.f32 %v756, %v821
        %869 = vmax.xlane.f32.xlu0 %v868
        %v870 = vpop.xlane.xlu0 %869
        %v871 = vmax.f32 %v759, %v824
        %872 = vmax.xlane.f32.xlu0 %v871
        %v873 = vpop.xlane.xlu0 %872
        %v874 = vmax.f32 %v762, %v827
        %875 = vmax.xlane.f32.xlu0 %v874
        %v876 = vpop.xlane.xlu0 %875
        %v877 = vmax.f32 %v765, %v830
        %878 = vmax.xlane.f32.xlu0 %v877
        %v879 = vpop.xlane.xlu0 %878
        %v880 = vmax.f32 %v768, %v833
        %881 = vmax.xlane.f32.xlu0 %v880
        %v882 = vpop.xlane.xlu0 %881
        %v883 = vmax.f32 %v771, %v836
        %884 = vmax.xlane.f32.xlu0 %v883
        %v885 = vpop.xlane.xlu0 %884
        %v886 = vmax.f32 %v774, %v839
        %887 = vmax.xlane.f32.xlu0 %v886
        %v888 = vpop.xlane.xlu0 %887
        %v889 = vmax.f32 %v777, %v842
        %890 = vmax.xlane.f32.xlu0 %v889
        %v891 = vpop.xlane.xlu0 %890
        %v892 = vmax.f32 %v780, %v845
        %893 = vmax.xlane.f32.xlu0 %v892
        %v894 = vpop.xlane.xlu0 %893
        %v895 = vsub.f32 %v735, %v849
        %v896 = vsub.f32 %v800, %v849
        %v897 = vsub.f32 %v738, %v852
        %v898 = vsub.f32 %v803, %v852
        %v899 = vsub.f32 %v741, %v855
        %v900 = vsub.f32 %v806, %v855
        %v901 = vsub.f32 %v744, %v858
        %v902 = vsub.f32 %v809, %v858
        %v903 = vsub.f32 %v747, %v861
        %v904 = vsub.f32 %v812, %v861
        %v905 = vsub.f32 %v750, %v864
        %v906 = vsub.f32 %v815, %v864
        %v907 = vsub.f32 %v753, %v867
        %v908 = vsub.f32 %v818, %v867
        %v909 = vsub.f32 %v756, %v870
        %v910 = vsub.f32 %v821, %v870
        %v911 = vsub.f32 %v759, %v873
        %v912 = vsub.f32 %v824, %v873
        %v913 = vsub.f32 %v762, %v876
        %v914 = vsub.f32 %v827, %v876
        %v915 = vsub.f32 %v765, %v879
        %v916 = vsub.f32 %v830, %v879
        %v917 = vsub.f32 %v768, %v882
        %v918 = vsub.f32 %v833, %v882
        %v919 = vsub.f32 %v771, %v885
        %v920 = vsub.f32 %v836, %v885
        %v921 = vsub.f32 %v774, %v888
        %v922 = vsub.f32 %v839, %v888
        %v923 = vsub.f32 %v777, %v891
        %v924 = vsub.f32 %v842, %v891
        %v925 = vsub.f32 %v780, %v894
        %v926 = vsub.f32 %v845, %v894
        %v927 = vmul.f32 %v895, 1.442695
        %v928 = vpow.pop %v927
        %v929 = vmul.f32 %v896, 1.442695
        %v930 = vpow.pop %v929
        %v931 = vmul.f32 %v897, 1.442695
        %v932 = vpow.pop %v931
        %v933 = vmul.f32 %v898, 1.442695
        %v934 = vpow.pop %v933
        %v935 = vmul.f32 %v899, 1.442695
        %v936 = vpow.pop %v935
        %v937 = vmul.f32 %v900, 1.442695
        %v938 = vpow.pop %v937
        %v939 = vmul.f32 %v901, 1.442695
        %v940 = vpow.pop %v939
        %v941 = vmul.f32 %v902, 1.442695
        %v942 = vpow.pop %v941
        %v943 = vmul.f32 %v903, 1.442695
        %v944 = vpow.pop %v943
        %v945 = vmul.f32 %v904, 1.442695
        %v946 = vpow.pop %v945
        %v947 = vmul.f32 %v905, 1.442695
        %v948 = vpow.pop %v947
        %v949 = vmul.f32 %v906, 1.442695
        %v950 = vpow.pop %v949
        %v951 = vmul.f32 %v907, 1.442695
        %v952 = vpow.pop %v951
        %v953 = vmul.f32 %v908, 1.442695
        %v954 = vpow.pop %v953
        %v955 = vmul.f32 %v909, 1.442695
        %v956 = vpow.pop %v955
        %v957 = vmul.f32 %v910, 1.442695
        %v958 = vpow.pop %v957
        %v959 = vmul.f32 %v911, 1.442695
        %v960 = vpow.pop %v959
        %v961 = vmul.f32 %v912, 1.442695
        %v962 = vpow.pop %v961
        %v963 = vmul.f32 %v913, 1.442695
        %v964 = vpow.pop %v963
        %v965 = vmul.f32 %v914, 1.442695
        %v966 = vpow.pop %v965
        %v967 = vmul.f32 %v915, 1.442695
        %v968 = vpow.pop %v967
        %v969 = vmul.f32 %v916, 1.442695
        %v970 = vpow.pop %v969
        %v971 = vmul.f32 %v917, 1.442695
        %v972 = vpow.pop %v971
        %v973 = vmul.f32 %v918, 1.442695
        %v974 = vpow.pop %v973
        %v975 = vmul.f32 %v919, 1.442695
        %v976 = vpow.pop %v975
        %v977 = vmul.f32 %v920, 1.442695
        %v978 = vpow.pop %v977
        %v979 = vmul.f32 %v921, 1.442695
        %v980 = vpow.pop %v979
        %v981 = vmul.f32 %v922, 1.442695
        %v982 = vpow.pop %v981
        %v983 = vmul.f32 %v923, 1.442695
        %v984 = vpow.pop %v983
        %v985 = vmul.f32 %v924, 1.442695
        %v986 = vpow.pop %v985
        %v987 = vmul.f32 %v925, 1.442695
        %v988 = vpow.pop %v987
        %v989 = vmul.f32 %v926, 1.442695
        %v990 = vpow.pop %v989
        %v991 = vadd.f32 %v928, %v930
        %992 = vadd.xlane.f32.xlu0 %v991
        %v993 = vpop.xlane.xlu0 %992
        %v994 = vadd.f32 %v932, %v934
        %995 = vadd.xlane.f32.xlu0 %v994
        %v996 = vpop.xlane.xlu0 %995
        %v997 = vadd.f32 %v936, %v938
        %998 = vadd.xlane.f32.xlu0 %v997
        %v999 = vpop.xlane.xlu0 %998
        %v1000 = vadd.f32 %v940, %v942
        %1001 = vadd.xlane.f32.xlu0 %v1000
        %v1002 = vpop.xlane.xlu0 %1001
        %v1003 = vadd.f32 %v944, %v946
        %1004 = vadd.xlane.f32.xlu0 %v1003
        %v1005 = vpop.xlane.xlu0 %1004
        %v1006 = vadd.f32 %v948, %v950
        %1007 = vadd.xlane.f32.xlu0 %v1006
        %v1008 = vpop.xlane.xlu0 %1007
        %v1009 = vadd.f32 %v952, %v954
        %1010 = vadd.xlane.f32.xlu0 %v1009
        %v1011 = vpop.xlane.xlu0 %1010
        %v1012 = vadd.f32 %v956, %v958
        %1013 = vadd.xlane.f32.xlu0 %v1012
        %v1014 = vpop.xlane.xlu0 %1013
        %v1015 = vadd.f32 %v960, %v962
        %1016 = vadd.xlane.f32.xlu0 %v1015
        %v1017 = vpop.xlane.xlu0 %1016
        %v1018 = vadd.f32 %v964, %v966
        %1019 = vadd.xlane.f32.xlu0 %v1018
        %v1020 = vpop.xlane.xlu0 %1019
        %v1021 = vadd.f32 %v968, %v970
        %1022 = vadd.xlane.f32.xlu0 %v1021
        %v1023 = vpop.xlane.xlu0 %1022
        %v1024 = vadd.f32 %v972, %v974
        %1025 = vadd.xlane.f32.xlu0 %v1024
        %v1026 = vpop.xlane.xlu0 %1025
        %v1027 = vadd.f32 %v976, %v978
        %1028 = vadd.xlane.f32.xlu0 %v1027
        %v1029 = vpop.xlane.xlu0 %1028
        %v1030 = vadd.f32 %v980, %v982
        %1031 = vadd.xlane.f32.xlu0 %v1030
        %v1032 = vpop.xlane.xlu0 %1031
        %v1033 = vadd.f32 %v984, %v986
        %1034 = vadd.xlane.f32.xlu0 %v1033
        %v1035 = vpop.xlane.xlu0 %1034
        %v1036 = vadd.f32 %v988, %v990
        %1037 = vadd.xlane.f32.xlu0 %v1036
        %v1038 = vpop.xlane.xlu0 %1037
        %v1039 = vrcp.pop %v993
        %v1040 = vrcp.pop %v996
        %v1041 = vrcp.pop %v999
        %v1042 = vrcp.pop %v1002
        %v1043 = vrcp.pop %v1005
        %v1044 = vrcp.pop %v1008
        %v1045 = vrcp.pop %v1011
        %v1046 = vrcp.pop %v1014
        %v1047 = vrcp.pop %v1017
        %v1048 = vrcp.pop %v1020
        %v1049 = vrcp.pop %v1023
        %v1050 = vrcp.pop %v1026
        %v1051 = vrcp.pop %v1029
        %v1052 = vrcp.pop %v1032
        %v1053 = vrcp.pop %v1035
        %v1054 = vrcp.pop %v1038
        %v1055 = vmul.f32 %v928, %v1039
        %v1056 = vmul.f32 %v930, %v1039
        %v1057 = vmul.f32 %v932, %v1040
        %v1058 = vmul.f32 %v934, %v1040
        %v1059 = vmul.f32 %v936, %v1041
        %v1060 = vmul.f32 %v938, %v1041
        %v1061 = vmul.f32 %v940, %v1042
        %v1062 = vmul.f32 %v942, %v1042
        %v1063 = vmul.f32 %v944, %v1043
        %v1064 = vmul.f32 %v946, %v1043
        %v1065 = vmul.f32 %v948, %v1044
        %v1066 = vmul.f32 %v950, %v1044
        %v1067 = vmul.f32 %v952, %v1045
        %v1068 = vmul.f32 %v954, %v1045
        %v1069 = vmul.f32 %v956, %v1046
        %v1070 = vmul.f32 %v958, %v1046
        %v1071 = vmul.f32 %v960, %v1047
        %v1072 = vmul.f32 %v962, %v1047
        %v1073 = vmul.f32 %v964, %v1048
        %v1074 = vmul.f32 %v966, %v1048
        %v1075 = vmul.f32 %v968, %v1049
        %v1076 = vmul.f32 %v970, %v1049
        %v1077 = vmul.f32 %v972, %v1050
        %v1078 = vmul.f32 %v974, %v1050
        %v1079 = vmul.f32 %v976, %v1051
        %v1080 = vmul.f32 %v978, %v1051
        %v1081 = vmul.f32 %v980, %v1052
        %v1082 = vmul.f32 %v982, %v1052
        %v1083 = vmul.f32 %v984, %v1053
        %v1084 = vmul.f32 %v986, %v1053
        %v1085 = vmul.f32 %v988, %v1054
        %v1086 = vmul.f32 %v990, %v1054
        %1087 = vmatpush.xpose.msra.mxu0 %v1085
        %1088 = vmatpush.xpose.msra.mxu0 %v1083
        %1089 = vmatpush.xpose.msra.mxu0 %v1081
        %1090 = vmatpush.xpose.msra.mxu0 %v1079
        %1091 = vmatpush.xpose.msra.mxu0 %v1077
        %1092 = vmatpush.xpose.msra.mxu0 %v1075
        %1093 = vmatpush.xpose.msra.mxu0 %v1073
        %1094 = vmatpush.xpose.msra.mxu0 %v1071
        %1095 = vmatpush.xpose.msra.mxu0 %v1069
        %1096 = vmatpush.xpose.msra.mxu0 %v1067
        %1097 = vmatpush.xpose.msra.mxu0 %v1065
        %1098 = vmatpush.xpose.msra.mxu0 %v1063
        %1099 = vmatpush.xpose.msra.mxu0 %v1061
        %1100 = vmatpush.xpose.msra.mxu0 %v1059
        %1101 = vmatpush.xpose.msra.mxu0 %v1057
        %1102 = vmatpush.xpose.msra.mxu0 %v1055
        %1103 = vmatmul.f32.gmra.mxu0 %v468
        %v1104 = vpop.f32.mrf.mxu0
        %v1105 = vadd.f32 0.0, %v1104
        %1106 = vmatmul.f32.gmra.mxu0 %v471
        %v1107 = vpop.f32.mrf.mxu0
        %v1108 = vadd.f32 0.0, %v1107
        %1109 = vmatmul.f32.gmra.mxu0 %v474
        %v1110 = vpop.f32.mrf.mxu0
        %v1111 = vadd.f32 0.0, %v1110
        %1112 = vmatmul.f32.gmra.mxu0 %v477
        %v1113 = vpop.f32.mrf.mxu0
        %v1114 = vadd.f32 0.0, %v1113
        %1115 = vdwg.mxu0
        %1116 = vmatpush.xpose.msra.mxu0 %v1086
        %1117 = vmatpush.xpose.msra.mxu0 %v1084
        %1118 = vmatpush.xpose.msra.mxu0 %v1082
        %1119 = vmatpush.xpose.msra.mxu0 %v1080
        %1120 = vmatpush.xpose.msra.mxu0 %v1078
        %1121 = vmatpush.xpose.msra.mxu0 %v1076
        %1122 = vmatpush.xpose.msra.mxu0 %v1074
        %1123 = vmatpush.xpose.msra.mxu0 %v1072
        %1124 = vmatpush.xpose.msra.mxu0 %v1070
        %1125 = vmatpush.xpose.msra.mxu0 %v1068
        %1126 = vmatpush.xpose.msra.mxu0 %v1066
        %1127 = vmatpush.xpose.msra.mxu0 %v1064
        %1128 = vmatpush.xpose.msra.mxu0 %v1062
        %1129 = vmatpush.xpose.msra.mxu0 %v1060
        %1130 = vmatpush.xpose.msra.mxu0 %v1058
        %1131 = vmatpush.xpose.msra.mxu0 %v1056
        %1132 = vmatmul.f32.gmra.mxu0 %v497
        %v1133 = vpop.f32.mrf.mxu0
        %v1134 = vadd.f32 %v1105, %v1133
        %1135 = vmatmul.f32.gmra.mxu0 %v500
        %v1136 = vpop.f32.mrf.mxu0
        %v1137 = vadd.f32 %v1108, %v1136
        %1138 = vmatmul.f32.gmra.mxu0 %v503
        %v1139 = vpop.f32.mrf.mxu0
        %v1140 = vadd.f32 %v1111, %v1139
        %1141 = vmatmul.f32.gmra.mxu0 %v506
        %v1142 = vpop.f32.mrf.mxu0
        %v1143 = vadd.f32 %v1114, %v1142
        %1144 = vdwg.mxu0
        %v1145 = vld [vmem:[#allocation2] sm:$0x1]
        %v1147 = vperm.slane %v1145, 0
        %1148 = vset.pattern.permute.xlu0 0
        %1149 = vperm.xlu0 %1148, %v1147
        %v1150 = vpop.permute.xlu0 %1149
        %v1152 = vmul.f32 %v1150, %v1134
        %v1153 = vmul.f32 %v1150, %v1137
        %v1154 = vmul.f32 %v1150, %v1140
        %v1155 = vmul.f32 %v1150, %v1143
        %v1156 = vadd.f32 %v1152, %v355
        %v1157 = vadd.f32 %v1153, %v356
        %v1158 = vadd.f32 %v1154, %v357
        %v1159 = vadd.f32 %v1155, %v358
        %1160 = vst [vmem:[%s341] sm:$0xff] %v1156
        %1161 = vst [vmem:[%s341 + $0x8] sm:$0xff] %v1157
        %1162 = vst [vmem:[%s341 + $0x10] sm:$0xff] %v1158
        %1163 = vst [vmem:[%s341 + $0x18] sm:$0xff] %v1159
        %s1164 = sand.u32 %s222, 1
        %s1165 = scalar_lea.sflag [#allocation5], %s1164
        %s1166 = sand.u32 %s222, 1
        %s1167 = smul.addr %s1166, 32
        %s1168 = scalar_lea.vmem [#allocation6], %s1167
        // Predicated region
        $region57: #{tpu_custom_call.1} parent=51 // pred_check
          %p1169 = pneg %p232
        $region58: #{tpu_custom_call.1} parent=51 // pred_check_branch
          %1171 = sbr.rel (%p1169) target = $region60
        $region59: #{tpu_custom_call.1} parent=51 // pred_region
          %1173 = vsyncadd %s1165, 0
          %s1174 = smul.addr %s31, 8
          %s1175 = sadd.s32 %s32, %s1174
          %s1176 = smul.addr %s1175, 8
          %s1177 = scalar_lea.hbm %s8, %s1176
          %s1178 = sshll.u32 %s1168, 4
          %s1179 = int_to_ptr.vmem [resolvable:$true] %s1178
          %s1180 = sshll.u32 %s1177, 4
          %s1181 = int_to_ptr.hbm [resolvable:$true] %s1180
          %1186 = dma.vmem_to_hbm [thread:$0]  %s1179, 512, %s1181, %s1165, 128, 256, 8
        $region60: #{tpu_custom_call.1} parent=51 // pred_fallthru
          _
      $region52: #{tpu_custom_call.1} parent=5 // pred_fallthru
        _
      %p1187 = scmp.le.s32.totalorder 2, %s22
      // Predicated region
      $region61: #{tpu_custom_call.1} parent=5 // pred_check
        %p1188 = pneg %p1187
      $region62: #{tpu_custom_call.1} parent=5 // pred_check_branch
        %1190 = sbr.rel (%p1188) target = $region64
      $region63: #{tpu_custom_call.1} parent=5 // pred_region
        %s1191 = ssub.s32 %s22, 2
        // Predicated region
        $region65: #{tpu_custom_call.1} parent=63 // pred_check
          %p1192 = pneg %p238
        $region66: #{tpu_custom_call.1} parent=63 // pred_check_branch
          %1194 = sbr.rel (%p1192) target = $region68
        $region67: #{tpu_custom_call.1} parent=63 // pred_region
          %s1195 = sand.u32 %s223, 1
          %s1196 = scalar_lea.sflag [#allocation5], %s1195
          %s1197 = sand.u32 %s223, 1
          %s1198 = smul.addr %s1197, 32
          %s1199 = scalar_lea.vmem [#allocation6], %s1198
          %1201 = dma.done %s1196, 512
        $region68: #{tpu_custom_call.1} parent=63 // pred_fallthru
          _
      $region64: #{tpu_custom_call.1} parent=5 // pred_fallthru
        _
    $region6: #{tpu_custom_call.1} parent=1 // loop_footer
      %s26 = sadd.s32 1, %s22
    $region7: #{tpu_custom_call.1} parent=1 // loop_footer_branch
      %21 = sbr.rel target = $region3
    $region8: #{tpu_custom_call.1} parent=1 // loop_exit
      _
    %1202 = vsyncpa [#allocation4], 1
    %s1203 = scalar_lea.sflag [#allocation4], 1
    %1204 = vsyncpa %s1203, 1
    %1205 = vsyncpa [#allocation5], 1
    %s1206 = scalar_lea.sflag [#allocation5], 1
    %1207 = vsyncpa %s1206, 1

</llo_original>
